<compile_context>
chip_gen: v7x
topology: tpu7x:2x2x1
jax: 0.10.0
libtpu: 0.0.40
codegen_flags: <defaults>
</compile_context>

<pallas_src>
import functools

import jax
import jax.numpy as jnp
from jax.experimental import pallas as pl
from jax.experimental.pallas import tpu as pltpu


def _round_up(x, m):
    return pl.cdiv(x, m) * m


def _vmem_capacity_bytes():
    try:
        return int(pltpu.get_tpu_info().vmem_capacity_bytes)
    except Exception:
        return 64 * 1024 * 1024  # conservative fallback (v7x per-TensorCore)


def _shortcut_kernel(x_ref, w_ref, shift_ref, o_ref):
    # x_ref:     (C_in, TP)     pixel tile of the strided input (channels on sublanes)
    # w_ref:     (C_out, C_in)  bf16 1x1-conv weight with BN scale folded in (VMEM-resident)
    # shift_ref: (C_out, 1)     f32 folded shift = beta + (bias - mean) * scale
    # o_ref:     (C_out, TP)
    x = x_ref[...].astype(w_ref.dtype)                      # no-op on the bf16 path
    y = jnp.dot(w_ref[...], x, preferred_element_type=jnp.float32)   # (C_out, TP) f32
    y = y + shift_ref[...]                                  # per-channel broadcast along lanes
    # TODO(synk): activation=None in this config; apply a jnp activation here if configured.
    o_ref[...] = y.astype(o_ref.dtype)


@functools.partial(jax.jit, static_argnames=("stride", "compute_dtype", "out_dtype"))
def resnet_shortcut(x, w, b, gamma, beta, running_mean, running_var,
                    stride=2, eps=1e-5, compute_dtype=jnp.bfloat16, out_dtype=None):
    """ResnetShortcut conv branch: 1x1 conv (stride) + BatchNorm2d (inference stats).

    x: (N, C_in, H, W) NCHW.  Returns (N, C_out, H//stride, W//stride) in
    `out_dtype` (default: compute_dtype == bf16 to halve HBM writeback; pass
    out_dtype=x.dtype if the consumer needs f32).
    """
    n, c_in, h, wdt = x.shape
    c_out = w.shape[0]
    if out_dtype is None:
        out_dtype = compute_dtype

    # ---- glue: stride-s spatial subsample (+ bf16 cast), kept NCHW -----------
    # TODO(synk): this is the last remaining extra HBM pass; NHWC-resident
    # activations or allow_input_fusion would fold it into the kernel's DMAs.
    if stride > 1:
        xs = x[:, :, ::stride, ::stride].astype(compute_dtype)  # one fused slice+cast copy
    else:
        xs = x                                                   # no copy; cast in-kernel
    ho, wo = xs.shape[2], xs.shape[3]
    p = ho * wo
    xs = xs.reshape(n, c_in, p)                                  # free (contiguous)

    # ---- fold conv bias + BatchNorm into weight / shift (host side, f32) -----
    scale = gamma / jnp.sqrt(running_var + eps)                              # (C_out,)
    shift = (beta + (b - running_mean) * scale).astype(jnp.float32).reshape(c_out, 1)
    wm = (w.reshape(c_out, c_in) * scale[:, None]).astype(compute_dtype)     # (C_out, C_in)

    # ---- tiling: pixel tile TP along the lane axis ----------------------------
    xs_b = jnp.dtype(xs.dtype).itemsize
    out_b = jnp.dtype(out_dtype).itemsize
    w_b = jnp.dtype(compute_dtype).itemsize
    vmem_cap = _vmem_capacity_bytes()

    fixed = 2 * c_out * c_in * w_b + 2 * c_out * 4          # weight + shift (worst-case 2 bufs)
    per_tp = 2 * (c_in * xs_b + c_out * out_b)               # double-buffered x + out tiles
    budget = int(0.4 * vmem_cap)
    tp_cap = max(128, min(8192, (budget - fixed) // max(per_tp, 1)))
    tp_cap = (tp_cap // 128) * 128

    if p <= tp_cap:
        tp = p                      # full-row block: always layout-legal, no padding
    else:
        tp = tp_cap                 # 128-multiple block; Pallas handles the ragged last block
    # keep >= 2 grid steps so both v7x TensorCores get work
    if n * pl.cdiv(p, tp) < 2 and p >= 256:
        tp = _round_up(pl.cdiv(p, 2), 128)
    n_pt = pl.cdiv(p, tp)

    # ---- VMEM / cost bookkeeping ----------------------------------------------
    vmem_est = (2 * tp * c_in * xs_b + 2 * tp * c_out * out_b
                + 2 * c_out * c_in * w_b + 2 * c_out * 4)
    vmem_limit = int(min(max(2 * vmem_est, 32 * 1024 * 1024), int(vmem_cap * 0.9)))
    cost = pl.CostEstimate(
        flops=2 * n * p * c_in * c_out,
        transcendentals=0,
        bytes_accessed=(n * p * c_in * xs_b + c_out * c_in * w_b
                        + c_out * 4 + n * p * c_out * out_b),
    )

    out = pl.pallas_call(
        _shortcut_kernel,
        out_shape=jax.ShapeDtypeStruct((n, c_out, p), out_dtype),
        grid_spec=pltpu.PrefetchScalarGridSpec(
            num_scalar_prefetch=0,
            grid=(n, n_pt),
            in_specs=[
                pl.BlockSpec((None, c_in, tp), lambda i, j: (i, 0, j)),
                pl.BlockSpec((c_out, c_in), lambda i, j: (0, 0)),
                pl.BlockSpec((c_out, 1), lambda i, j: (0, 0)),
            ],
            out_specs=pl.BlockSpec((None, c_out, tp), lambda i, j: (i, 0, j)),
        ),
        compiler_params=pltpu.CompilerParams(
            dimension_semantics=("parallel", "parallel"),
            vmem_limit_bytes=vmem_limit,
        ),
        cost_estimate=cost,
    )(xs, wm, shift)

    # free reshape back to NCHW spatial layout (no transpose, no copy)
    return out.reshape(n, c_out, ho, wo)


if __name__ == "__main__":
    key = jax.random.PRNGKey(0)
    k_x, k_w, k_b, k_g, k_be = jax.random.split(key, 5)

    N, C_IN, H, W = 2, 4, 16, 16
    C_OUT, STRIDE = 8, 2
    # TODO(synk): this toy channel count (C_in=4) underutilizes the MXU/vregs;
    # tune and benchmark with real ResNet shapes (C_in>=64, C_out multiple of 128).

    x = jax.random.normal(k_x, (N, C_IN, H, W), dtype=jnp.float32)

    # Synthetic parameters with nn.Conv2d(C_IN, C_OUT, 1) + nn.BatchNorm2d(C_OUT) shapes.
    w = jax.random.normal(k_w, (C_OUT, C_IN, 1, 1), dtype=jnp.float32) * 0.1
    b = jax.random.normal(k_b, (C_OUT,), dtype=jnp.float32) * 0.1
    gamma = 1.0 + 0.1 * jax.random.normal(k_g, (C_OUT,), dtype=jnp.float32)
    beta = 0.1 * jax.random.normal(k_be, (C_OUT,), dtype=jnp.float32)
    running_mean = jnp.zeros((C_OUT,), dtype=jnp.float32)
    running_var = jnp.ones((C_OUT,), dtype=jnp.float32)

    out = resnet_shortcut(x, w, b, gamma, beta, running_mean, running_var,
                          stride=STRIDE)
    jax.block_until_ready(out)

    # Pure-JAX f32 reference (kernel computes in bf16 -> looser tolerance).
    xs = x[:, :, ::STRIDE, ::STRIDE]
    ref = jnp.einsum("nchw,oc->nohw", xs, w.reshape(C_OUT, C_IN)) + b[None, :, None, None]
    ref = (ref - running_mean[None, :, None, None]) / jnp.sqrt(
        running_var[None, :, None, None] + 1e-5)
    ref = ref * gamma[None, :, None, None] + beta[None, :, None, None]

    assert out.shape == (N, C_OUT, H // STRIDE, W // STRIDE)
    out_f32 = out.astype(jnp.float32)
    assert jnp.allclose(out_f32, ref, atol=2e-2, rtol=2e-2), float(jnp.max(jnp.abs(out_f32 - ref)))

    print("KERNEL_OK")
</pallas_src>

<mosaic_0001>
module attributes {stable_mosaic.version = 11 : i64} {
  func.func @_shortcut_kernel(%arg0: i32, %arg1: i32, %arg2: memref<1x4x64xbf16, #tpu.memory_space<vmem>>, %arg3: memref<8x4xbf16, #tpu.memory_space<vmem>>, %arg4: memref<8x1xf32, #tpu.memory_space<vmem>>, %arg5: memref<1x8x64xbf16, #tpu.memory_space<vmem>>) attributes {dimension_semantics = [#tpu.dimension_semantics<parallel>, #tpu.dimension_semantics<parallel>], iteration_bounds = array<i64: 2, 1>, scalar_prefetch = 0 : i64, scratch_operands = 0 : i64, tpu.core_type = #tpu.core_type<tc>, window_params = [{transform_indices = @transform_0, window_bounds = array<i64: 1, 4, 64>}, {pipeline_mode = #tpu.pipeline_mode<synchronous>, transform_indices = @transform_1, window_bounds = array<i64: 8, 4>}, {pipeline_mode = #tpu.pipeline_mode<synchronous>, transform_indices = @transform_2, window_bounds = array<i64: 8, 1>}, {transform_indices = @transform_3, window_bounds = array<i64: 1, 8, 64>}]} {
    %c0 = arith.constant 0 : index
    %c0_0 = arith.constant 0 : index
    %c0_1 = arith.constant 0 : index
    %0 = vector.load %arg2[%c0, %c0_0, %c0_1] : memref<1x4x64xbf16, #tpu.memory_space<vmem>>, vector<1x4x64xbf16>
    %1 = vector.shape_cast %0 : vector<1x4x64xbf16> to vector<4x64xbf16>
    %c0_2 = arith.constant 0 : index
    %c0_3 = arith.constant 0 : index
    %2 = vector.load %arg3[%c0_2, %c0_3] : memref<8x4xbf16, #tpu.memory_space<vmem>>, vector<8x4xbf16>
    %cst = arith.constant dense<0.000000e+00> : vector<8x64xf32>
    %3 = tpu.matmul %2, %1, %cst {dimension_numbers = #tpu.dot_dimension_numbers<[1], [0], [0], [1], [0, 0, 1, 1], [], []>} : vector<8x4xbf16>, vector<4x64xbf16>, vector<8x64xf32> -> vector<8x64xf32>
    %c0_4 = arith.constant 0 : index
    %c0_5 = arith.constant 0 : index
    %4 = vector.load %arg4[%c0_4, %c0_5] : memref<8x1xf32, #tpu.memory_space<vmem>>, vector<8x1xf32>
    %5 = vector.broadcast %4 : vector<8x1xf32> to vector<8x64xf32>
    %6 = arith.addf %3, %5 : vector<8x64xf32>
    %7 = arith.truncf %6 : vector<8x64xf32> to vector<8x64xbf16>
    %c0_6 = arith.constant 0 : index
    %c0_7 = arith.constant 0 : index
    %c0_8 = arith.constant 0 : index
    %8 = vector.load %arg5[%c0_6, %c0_7, %c0_8] : memref<1x8x64xbf16, #tpu.memory_space<vmem>>, vector<1x8x64xbf16>
    %9 = vector.shape_cast %8 : vector<1x8x64xbf16> to vector<8x64xbf16>
    %10 = vector.shape_cast %7 : vector<8x64xbf16> to vector<1x8x64xbf16>
    tpu.vector_store %arg5[%c0_6, %c0_7, %c0_8], %10 {strides = array<i32>} : memref<1x8x64xbf16, #tpu.memory_space<vmem>>, vector<1x8x64xbf16>,
    return
  }
  func.func @transform_0(%arg0: i32, %arg1: i32) -> (i32, i32, i32) {
    %c0_i32 = arith.constant 0 : i32
    %c0_i32_0 = arith.constant 0 : i32
    return %arg0, %c0_i32, %arg1 : i32, i32, i32
  }
  func.func @transform_1(%arg0: i32, %arg1: i32) -> (i32, i32) {
    %c0_i32 = arith.constant 0 : i32
    %c0_i32_0 = arith.constant 0 : i32
    %c0_i32_1 = arith.constant 0 : i32
    return %c0_i32, %c0_i32_0 : i32, i32
  }
  func.func @transform_2(%arg0: i32, %arg1: i32) -> (i32, i32) {
    %c0_i32 = arith.constant 0 : i32
    %c0_i32_0 = arith.constant 0 : i32
    %c0_i32_1 = arith.constant 0 : i32
    return %c0_i32, %c0_i32_0 : i32, i32
  }
  func.func @transform_3(%arg0: i32, %arg1: i32) -> (i32, i32, i32) {
    %c0_i32 = arith.constant 0 : i32
    %c0_i32_0 = arith.constant 0 : i32
    return %arg0, %c0_i32, %arg1 : i32, i32, i32
  }
}

</mosaic_0001>

<llo_original>
// kernel: resnet_shortcut.1
$region0: #{resnet_shortcut.1}
  #allocation0 [shape = 'u32[]', space=smem, size = 0x4, offset = 0x4, fixed_abs, tag = 'smem constant byte address 0x4 - core index']
  #allocation1 [shape = 'u32[144,128]{1,0:T(1,128)}', space=vmem, size = 0x12000, scoped, tag = 'internal scratch']
  %s0 = inlined_call_operand.vmem [shape: bf16[2,4,64], index: 0, kind: input, shape index: {}]
  %s1 = inlined_call_operand.vmem [shape: bf16[8,4], index: 1, kind: input, shape index: {}]
  %s2 = inlined_call_operand.vmem [shape: f32[8,1], index: 2, kind: input, shape index: {}]
  %s3 = inlined_call_operand.vmem [shape: bf16[2,8,64], index: 3, kind: output, shape index: {}]
  %s4 = sld [smem:[#allocation0]]
  $region45: #{resnet_shortcut.1} parent=0
    _
  %s6 = ssub.s32 1, %s4
  %s7 = scalar_select 0, %s6, %s4
  loop: start=0, step=1, limit=4
  $region2: #{resnet_shortcut.1} parent=0 // loop_pre_header
    _
  $region3: #{resnet_shortcut.1} parent=0 // loop_header
    %s9 = sphi 0, %s13
    %p10 = scmp.ge.s32.totalorder %s9, 4
    %s16 = sphi 0, %s28
    %s17 = sphi 0, %s24
    %s18 = sphi 0, %s16
    %s19 = sphi 0, %s17
    %s20 = sphi 0, %s18
    %s21 = sphi 0, %s19
    %s33 = sphi 0, %s35
    %s36 = sphi 0, %s33
    %s37 = sphi 0, %s36
    %s53 = sphi 0, %s37
    %s57 = sphi 0, %s57
    %s59 = sphi 0, %s57
    %s60 = sphi 0, %s59
    %s74 = sphi 0, %s60
    %s78 = sphi 0, %s78
    %s80 = sphi 0, %s78
    %s81 = sphi 0, %s80
    %s95 = sphi 0, %s81
    %s103 = sphi 0, %s105
    %s106 = sphi 0, %s103
    %s107 = sphi 0, %s106
    %s123 = sphi 0, %s107
  $region4: #{resnet_shortcut.1} parent=0 // loop_header_branch
    %12 = sbr.rel (%p10) target = $region8
  $region5: #{resnet_shortcut.1} parent=0 // loop_body
    %s14 = ssub.s32 %s9, 1
    %s15 = ssub.s32 %s9, 2
    %s22 = sadd.s32 1, %s17
    %p23 = scmp.ge.s32.totalorder %s22, 1
    %s24 = scalar_select %p23, 0, %s22
    %s25 = sadd.s32 1, %s16
    %s26 = scalar_select %p23, %s25, %s16
    %p27 = scmp.ge.s32.totalorder %s26, 2
    %s28 = scalar_select %p27, 0, %s26
    %s29 = ssub.s32 %s16, %s28
    %s30 = ssub.s32 %s17, %s24
    %s31 = sor.u32 %s29, %s30
    %p32 = scmp.eq.s32.totalorder %s31, 0
    %s34 = sadd.s32 %s33, 1
    %s35 = scalar_select %p32, %s33, %s34
    %p38 = pneg %p32
    %p39 = scmp.eq.s32.totalorder %s9, 1
    %p40 = por %p38, %p39
    %p41 = scmp.ne.s32.totalorder %s33, %s36
    %p42 = scmp.eq.s32.totalorder %s9, 0
    %p43 = por %p41, %p42
    %p44 = scmp.ne.s32.totalorder %s33, %s36
    %p45 = scmp.eq.s32.totalorder %s14, 1
    %p46 = por %p44, %p45
    %p47 = scmp.ne.s32.totalorder %s36, %s37
    %p48 = scmp.eq.s32.totalorder %s14, 0
    %p49 = por %p47, %p48
    %p50 = scmp.ne.s32.totalorder %s36, %s37
    %p51 = scmp.eq.s32.totalorder %s15, 1
    %p52 = por %p50, %p51
    %p54 = scmp.ne.s32.totalorder %s37, %s53
    %p55 = scmp.eq.s32.totalorder %s15, 0
    %p56 = por %p54, %p55
    %s58 = sadd.s32 %s57, 1
    %p61 = scmp.eq.s32.totalorder %s9, 1
    %p62 = scmp.ne.s32.totalorder %s57, %s59
    %p63 = scmp.eq.s32.totalorder %s9, 0
    %p64 = por %p62, %p63
    %p65 = scmp.ne.s32.totalorder %s57, %s59
    %p66 = scmp.eq.s32.totalorder %s14, 1
    %p67 = por %p65, %p66
    %p68 = scmp.ne.s32.totalorder %s59, %s60
    %p69 = scmp.eq.s32.totalorder %s14, 0
    %p70 = por %p68, %p69
    %p71 = scmp.ne.s32.totalorder %s59, %s60
    %p72 = scmp.eq.s32.totalorder %s15, 1
    %p73 = por %p71, %p72
    %p75 = scmp.ne.s32.totalorder %s60, %s74
    %p76 = scmp.eq.s32.totalorder %s15, 0
    %p77 = por %p75, %p76
    %s79 = sadd.s32 %s78, 1
    %p82 = scmp.eq.s32.totalorder %s9, 1
    %p83 = scmp.ne.s32.totalorder %s78, %s80
    %p84 = scmp.eq.s32.totalorder %s9, 0
    %p85 = por %p83, %p84
    %p86 = scmp.ne.s32.totalorder %s78, %s80
    %p87 = scmp.eq.s32.totalorder %s14, 1
    %p88 = por %p86, %p87
    %p89 = scmp.ne.s32.totalorder %s80, %s81
    %p90 = scmp.eq.s32.totalorder %s14, 0
    %p91 = por %p89, %p90
    %p92 = scmp.ne.s32.totalorder %s80, %s81
    %p93 = scmp.eq.s32.totalorder %s15, 1
    %p94 = por %p92, %p93
    %p96 = scmp.ne.s32.totalorder %s81, %s95
    %p97 = scmp.eq.s32.totalorder %s15, 0
    %p98 = por %p96, %p97
    %s99 = ssub.s32 %s16, %s28
    %s100 = ssub.s32 %s17, %s24
    %s101 = sor.u32 %s99, %s100
    %p102 = scmp.eq.s32.totalorder %s101, 0
    %s104 = sadd.s32 %s103, 1
    %s105 = scalar_select %p102, %s103, %s104
    %p108 = pneg %p102
    %p109 = scmp.eq.s32.totalorder %s9, 1
    %p110 = por %p108, %p109
    %p111 = scmp.ne.s32.totalorder %s103, %s106
    %p112 = scmp.eq.s32.totalorder %s9, 0
    %p113 = por %p111, %p112
    %p114 = scmp.ne.s32.totalorder %s103, %s106
    %p115 = scmp.eq.s32.totalorder %s14, 1
    %p116 = por %p114, %p115
    %p117 = scmp.ne.s32.totalorder %s106, %s107
    %p118 = scmp.eq.s32.totalorder %s14, 0
    %p119 = por %p117, %p118
    %p120 = scmp.ne.s32.totalorder %s106, %s107
    %p121 = scmp.eq.s32.totalorder %s15, 1
    %p122 = por %p120, %p121
    %p124 = scmp.ne.s32.totalorder %s107, %s123
    %p125 = scmp.eq.s32.totalorder %s15, 0
    %p126 = por %p124, %p125
    %p127 = scmp.le.s32.totalorder 1, %s9
    %p128 = scmp.lt.s32.totalorder %s9, 3
    %p129 = pnand %p127, %p128
    %p130 = pneg %p129
    // Predicated region
    $region9: #{resnet_shortcut.1} parent=5 // pred_check
      _
    $region10: #{resnet_shortcut.1} parent=5 // pred_check_branch
      %132 = sbr.rel (%p129) target = $region12
    $region11: #{resnet_shortcut.1} parent=5 // pred_region
      %s133 = ssub.s32 %s9, 1
      // Predicated region
      $region13: #{resnet_shortcut.1} parent=11 // pred_check
        %p134 = pneg %p70
      $region14: #{resnet_shortcut.1} parent=11 // pred_check_branch
        %136 = sbr.rel (%p134) target = $region16
      $region15: #{resnet_shortcut.1} parent=11 // pred_region
        _
      $region16: #{resnet_shortcut.1} parent=11 // pred_fallthru
        _
      // Predicated region
      $region17: #{resnet_shortcut.1} parent=11 // pred_check
        %p137 = pneg %p91
      $region18: #{resnet_shortcut.1} parent=11 // pred_check_branch
        %139 = sbr.rel (%p137) target = $region20
      $region19: #{resnet_shortcut.1} parent=11 // pred_region
        _
      $region20: #{resnet_shortcut.1} parent=11 // pred_fallthru
        _
    $region12: #{resnet_shortcut.1} parent=5 // pred_fallthru
      _
    %p140 = scmp.lt.s32.totalorder %s9, 2
    // Predicated region
    $region21: #{resnet_shortcut.1} parent=5 // pred_check
      %p141 = pneg %p140
    $region22: #{resnet_shortcut.1} parent=5 // pred_check_branch
      %143 = sbr.rel (%p141) target = $region24
    $region23: #{resnet_shortcut.1} parent=5 // pred_region
      // Predicated region
      $region25: #{resnet_shortcut.1} parent=23 // pred_check
        %p144 = pneg %p43
      $region26: #{resnet_shortcut.1} parent=23 // pred_check_branch
        %146 = sbr.rel (%p144) target = $region28
      $region27: #{resnet_shortcut.1} parent=23 // pred_region
        %p147 = scmp.lt.s32.totalorder %s16, 1
        %s148 = scalar_select %p147, %s16, 1
        %p149 = scmp.lt.s32.totalorder %s17, 0
        %s150 = scalar_select %p149, %s17, 0
        %s151 = sadd.s32 %s150, %s148
        %s152 = smul.addr %s151, 2
        %s153 = scalar_lea.vmem %s0, %s152
      $region28: #{resnet_shortcut.1} parent=23 // pred_fallthru
        _
    $region24: #{resnet_shortcut.1} parent=5 // pred_fallthru
      _
    %p154 = scmp.le.s32.totalorder 1, %s9
    %p155 = scmp.lt.s32.totalorder %s9, 3
    %p156 = pnand %p154, %p155
    %p157 = pneg %p156
    // Predicated region
    $region29: #{resnet_shortcut.1} parent=5 // pred_check
      _
    $region30: #{resnet_shortcut.1} parent=5 // pred_check_branch
      %159 = sbr.rel (%p156) target = $region32
    $region31: #{resnet_shortcut.1} parent=5 // pred_region
      %s160 = ssub.s32 %s9, 1
      %p161 = scmp.lt.s32.totalorder %s18, 1
      %s162 = scalar_select %p161, %s18, 1
      %p163 = scmp.lt.s32.totalorder %s19, 0
      %s164 = scalar_select %p163, %s19, 0
      %s165 = sadd.s32 %s164, %s162
      %s166 = smul.addr %s165, 2
      %s167 = scalar_lea.vmem %s0, %s166
      %p168 = pneg %p49
      %p169 = pneg %p46
      %p170 = pneg %p70
      %p171 = pneg %p67
      %p172 = pneg %p91
      %p173 = pneg %p88
      %p174 = pneg %p119
      %p175 = pneg %p116
      %p176 = scmp.lt.s32.totalorder %s18, 1
      %s177 = scalar_select %p176, %s18, 1
      %p178 = scmp.lt.s32.totalorder %s19, 0
      %s179 = scalar_select %p178, %s19, 0
      %s180 = sadd.s32 %s179, %s177
      %s181 = smul.addr %s180, 4
      %s182 = scalar_lea.vmem %s3, %s181
      %p183 = scmp.lt.s32.totalorder %s18, 1
      %s184 = scalar_select %p183, %s18, 1
      %p185 = scmp.lt.s32.totalorder %s19, 0
      %s186 = scalar_select %p185, %s19, 0
      %s187 = sadd.s32 %s186, %s184
      %s188 = smul.addr %s187, 2
      %s189 = scalar_lea.vmem %s0, %s188
      %p190 = scmp.lt.s32.totalorder %s18, 1
      %s191 = scalar_select %p190, %s18, 1
      %p192 = scmp.lt.s32.totalorder %s19, 0
      %s193 = scalar_select %p192, %s19, 0
      %s194 = sadd.s32 %s193, %s191
      %s195 = smul.addr %s194, 4
      %s196 = scalar_lea.vmem %s3, %s195
      %v198 = vld [vmem:[%s189] sm:$0x3]
      %v199 = vld [vmem:[%s1] sm:$0xf]
      %v200 = vld [vmem:[%s2] sm:$0xff]
      %202 = vset.pattern.permute.xlu0 0
      %203 = vperm.xlu0 %202, %v200
      %v204 = vpop.permute.xlu0 %203
      %vm206 = vcmask 31744
      %v208 = vsel %vm206, %v199, 0
      %vm210 = vcmask 1041408
      %v212 = vsel %vm210, %v198, 0
      %214 = vmatprep.subr.bf16.mxu0 0
      %215 = vmatpush1.bf16.msra.mxu0 %v212
      %216 = vmatprep.subr.bf16.mxu0 0
      %217 = vmatpush1.bf16.msra.mxu0 0
      %218 = vmatprep.subr.bf16.mxu0 0
      %219 = vmatpush1.bf16.msra.mxu0 0
      %220 = vmatprep.subr.bf16.mxu0 0
      %221 = vmatpush1.bf16.msra.mxu0 0
      %222 = vmatprep.subr.bf16.mxu0 0
      %223 = vmatpush1.bf16.msra.mxu0 0
      %224 = vmatprep.subr.bf16.mxu0 0
      %225 = vmatpush1.bf16.msra.mxu0 0
      %226 = vmatprep.subr.bf16.mxu0 0
      %227 = vmatpush1.bf16.msra.mxu0 0
      %228 = vmatprep.subr.bf16.mxu0 0
      %229 = vmatpush1.bf16.msra.mxu0 0
      %230 = vmatprep.subr.bf16.mxu0 0
      %231 = vmatpush1.bf16.msra.mxu0 0
      %232 = vmatprep.subr.bf16.mxu0 0
      %233 = vmatpush1.bf16.msra.mxu0 0
      %234 = vmatprep.subr.bf16.mxu0 0
      %235 = vmatpush1.bf16.msra.mxu0 0
      %236 = vmatprep.subr.bf16.mxu0 0
      %237 = vmatpush1.bf16.msra.mxu0 0
      %238 = vmatprep.subr.bf16.mxu0 0
      %239 = vmatpush1.bf16.msra.mxu0 0
      %240 = vmatprep.subr.bf16.mxu0 0
      %241 = vmatpush1.bf16.msra.mxu0 0
      %242 = vmatprep.subr.bf16.mxu0 0
      %243 = vmatpush1.bf16.msra.mxu0 0
      %244 = vmatprep.subr.bf16.mxu0 0
      %245 = vmatpush1.bf16.msra.mxu0 0
      %246 = vmatprep.mubr.bf16.mxu0 0
      %247 = vmatmul.mubr.bf16.gmra.mrb[0].mxu0 %v208
      %v248 = vpop.f32.mrb[0].mxu0
      %v249 = vadd.f32 %v204, %v248
      %v250 = vpop.f32.mrb[0].mxu0
      %v251 = vpop.f32.mrb[0].mxu0
      %v252 = vpop.f32.mrb[0].mxu0
      %253 = vdwg.mxu0
      %v254 = vpack.c.bf16 %v249, %v249
      %vm255 = vcmask 519168
      %256 = vst.msk [vmem:[%s196] sm:$0xf] %vm255, %v254
      %p257 = scmp.lt.s32.totalorder %s18, 1
      %s258 = scalar_select %p257, %s18, 1
      %p259 = scmp.lt.s32.totalorder %s19, 0
      %s260 = scalar_select %p259, %s19, 0
      %s261 = sadd.s32 %s260, %s258
      %s262 = smul.addr %s261, 4
      %s263 = scalar_lea.vmem %s3, %s262
      // Predicated region
      $region33: #{resnet_shortcut.1} parent=31 // pred_check
        %p264 = pneg %p116
      $region34: #{resnet_shortcut.1} parent=31 // pred_check_branch
        %266 = sbr.rel (%p264) target = $region36
      $region35: #{resnet_shortcut.1} parent=31 // pred_region
        _
      $region36: #{resnet_shortcut.1} parent=31 // pred_fallthru
        _
    $region32: #{resnet_shortcut.1} parent=5 // pred_fallthru
      _
    %p267 = scmp.le.s32.totalorder 2, %s9
    // Predicated region
    $region37: #{resnet_shortcut.1} parent=5 // pred_check
      %p268 = pneg %p267
    $region38: #{resnet_shortcut.1} parent=5 // pred_check_branch
      %270 = sbr.rel (%p268) target = $region40
    $region39: #{resnet_shortcut.1} parent=5 // pred_region
      %s271 = ssub.s32 %s9, 2
      // Predicated region
      $region41: #{resnet_shortcut.1} parent=39 // pred_check
        %p272 = pneg %p122
      $region42: #{resnet_shortcut.1} parent=39 // pred_check_branch
        %274 = sbr.rel (%p272) target = $region44
      $region43: #{resnet_shortcut.1} parent=39 // pred_region
        %p275 = scmp.lt.s32.totalorder %s20, 1
        %s276 = scalar_select %p275, %s20, 1
        %p277 = scmp.lt.s32.totalorder %s21, 0
        %s278 = scalar_select %p277, %s21, 0
        %s279 = sadd.s32 %s278, %s276
        %s280 = smul.addr %s279, 4
        %s281 = scalar_lea.vmem %s3, %s280
      $region44: #{resnet_shortcut.1} parent=39 // pred_fallthru
        _
    $region40: #{resnet_shortcut.1} parent=5 // pred_fallthru
      _
  $region6: #{resnet_shortcut.1} parent=0 // loop_footer
    %s13 = sadd.s32 1, %s9
  $region7: #{resnet_shortcut.1} parent=0 // loop_footer_branch
    %8 = sbr.rel target = $region3
  $region8: #{resnet_shortcut.1} parent=0 // loop_exit
    _

</llo_original>
